<compile_context>
chip_gen: v6e
topology: v6e:2x2x1
jax: 0.10.0
libtpu: 0.0.40
codegen_flags: <defaults>
</compile_context>

<pallas_src>
import jax
import jax.numpy as jnp
from jax.experimental import pallas as pl
from jax.experimental.pallas import tpu as pltpu


def _linear_n1_kernel(x_ref, w_ref, b_ref, o_ref):
    # x_ref: (M, K)   w_ref: (1, K)  (PyTorch weight layout, out_features == 1)
    # b_ref: (1, 1)   o_ref: (M, 1)
    # Pure-VPU linear for N == 1:
    #   prod = x * w (sublane-broadcast), reduce over K, add bias.
    prod = x_ref[...] * w_ref[...]                        # (M, K) elementwise
    o_ref[...] = jnp.sum(prod, axis=1, keepdims=True) + b_ref[...]


def linear_pallas(x, weight, bias):
    """y = x @ weight.T + bias   (PyTorch nn.Linear(2, 1) semantics).

    x:      (M, K) float32
    weight: (N, K) float32   (PyTorch layout; this kernel requires N == 1)
    bias:   (N,)   float32
    returns (M, N) float32
    """
    M, K = x.shape
    N, Kw = weight.shape
    assert K == Kw and N == 1, "kernel is specialised for out_features == 1"
    # TODO(synk): for N or K >= 128 switch back to an MXU jnp.dot path with
    # M-tiled ("parallel") grid; unnecessary for this module's fixed (2, 1).

    x32 = x.astype(jnp.float32)                      # (M, K) — no padding
    w32 = weight.astype(jnp.float32)                 # (1, K) — no transpose/pad
    b32 = bias.astype(jnp.float32).reshape(1, 1)     # (1, 1)

    return pl.pallas_call(
        _linear_n1_kernel,
        out_shape=jax.ShapeDtypeStruct((M, N), jnp.float32),
        in_specs=[
            pl.BlockSpec(memory_space=pltpu.MemorySpace.VMEM),
            pl.BlockSpec(memory_space=pltpu.MemorySpace.VMEM),
            pl.BlockSpec(memory_space=pltpu.MemorySpace.VMEM),
        ],
        out_specs=pl.BlockSpec(memory_space=pltpu.MemorySpace.VMEM),
    )(x32, w32, b32)


if __name__ == "__main__":
    # Input matching the PyTorch script: the 4x2 XOR-style table.
    x = jnp.array([[0.0, 0.0],
                   [0.0, 1.0],
                   [1.0, 0.0],
                   [1.0, 1.0]], dtype=jnp.float32)

    # Deterministic parameter init for nn.Linear(2, 1): weight (1, 2), bias (1,).
    key = jax.random.PRNGKey(0)
    kw, kb = jax.random.split(key)
    bound = 1.0 / jnp.sqrt(2.0)  # PyTorch default uniform(-1/sqrt(fan_in), +)
    weight = jax.random.uniform(kw, (1, 2), jnp.float32, -bound, bound)
    bias = jax.random.uniform(kb, (1,), jnp.float32, -bound, bound)

    y = linear_pallas(x, weight, bias)
    jax.block_until_ready(y)

    # Reference check in plain JAX.
    y_ref = x @ weight.T + bias
    assert y.shape == (4, 1)
    assert jnp.allclose(y, y_ref, atol=1e-5, rtol=1e-5)

    print("KERNEL_OK")
</pallas_src>

<mosaic_0001>
module attributes {stable_mosaic.version = 11 : i64} {
  func.func @_linear_n1_kernel(%arg0: memref<4x2xf32, #tpu.memory_space<vmem>>, %arg1: memref<1x2xf32, #tpu.memory_space<vmem>>, %arg2: memref<1x1xf32, #tpu.memory_space<vmem>>, %arg3: memref<4x1xf32, #tpu.memory_space<vmem>>) attributes {dimension_semantics = [], scalar_prefetch = 0 : i64, scratch_operands = 0 : i64, tpu.core_type = #tpu.core_type<tc>} {
    %c0 = arith.constant 0 : index
    %c0_0 = arith.constant 0 : index
    %0 = vector.load %arg0[%c0, %c0_0] : memref<4x2xf32, #tpu.memory_space<vmem>>, vector<4x2xf32>
    %c0_1 = arith.constant 0 : index
    %c0_2 = arith.constant 0 : index
    %1 = vector.load %arg1[%c0_1, %c0_2] : memref<1x2xf32, #tpu.memory_space<vmem>>, vector<1x2xf32>
    %2 = vector.broadcast %1 : vector<1x2xf32> to vector<4x2xf32>
    %3 = arith.mulf %0, %2 : vector<4x2xf32>
    %cst = arith.constant dense<0.000000e+00> : vector<4xf32>
    %4 = vector.multi_reduction <add>, %3, %cst [1] : vector<4x2xf32> to vector<4xf32>
    %5 = vector.shape_cast %4 : vector<4xf32> to vector<4x1xf32>
    %c0_3 = arith.constant 0 : index
    %c0_4 = arith.constant 0 : index
    %6 = vector.load %arg2[%c0_3, %c0_4] : memref<1x1xf32, #tpu.memory_space<vmem>>, vector<1x1xf32>
    %7 = vector.broadcast %6 : vector<1x1xf32> to vector<4x1xf32>
    %8 = arith.addf %5, %7 : vector<4x1xf32>
    %c0_5 = arith.constant 0 : index
    %c0_6 = arith.constant 0 : index
    %9 = vector.load %arg3[%c0_5, %c0_6] : memref<4x1xf32, #tpu.memory_space<vmem>>, vector<4x1xf32>
    tpu.vector_store %arg3[%c0_5, %c0_6], %8 {strides = array<i32>} : memref<4x1xf32, #tpu.memory_space<vmem>>, vector<4x1xf32>,
    return
  }
}

</mosaic_0001>

<llo_original>
// kernel: tpu_custom_call.1
$region0: #{tpu_custom_call.1}
  #allocation0 [shape = 'u32[]', space=smem, size = 0x4, offset = 0x4, fixed_abs, tag = 'smem constant byte address 0x4 - core index']
  #allocation1 [shape = 'u32[144,128]{1,0:T(1,128)}', space=vmem, size = 0x12000, scoped, tag = 'internal scratch']
  #allocation2 [shape = 'f32[1,1]{1,0:T(1,128)S(1)}', space=vmem, size = 0x200, scoped, tag = 'scoped memory for tpu_custom_call.1']
  %s0 = inlined_call_operand.vmem [shape: f32[4,2], index: 0, kind: input, shape index: {}]
  %s1 = inlined_call_operand.vmem [shape: f32[1,2], index: 1, kind: input, shape index: {}]
  %s2 = inlined_call_operand.<no memory space> [shape: f32[1,1], index: 2, kind: input, shape index: {}]
  %s3 = inlined_call_operand.vmem [shape: f32[4,1], index: 3, kind: output, shape index: {}]
  %s4 = sld [smem:[#allocation0]]
  $region22: #{tpu_custom_call.1} parent=0
    _
  %s6 = ssub.s32 1, %s4
  %s7 = scalar_select 0, %s6, %s4
  %v8 = vstv %s2
  %9 = vst [vmem:[#allocation2] sm:$0x1] %v8
  // Predicated region
  $region2: #{tpu_custom_call.1} parent=0 // pred_check
    _
  $region3: #{tpu_custom_call.1} parent=0 // pred_check_branch
    %11 = sbr.rel (0) target = $region5
  $region4: #{tpu_custom_call.1} parent=0 // pred_region
    _
  $region5: #{tpu_custom_call.1} parent=0 // pred_fallthru
    _
  // Predicated region
  $region6: #{tpu_custom_call.1} parent=0 // pred_check
    _
  $region7: #{tpu_custom_call.1} parent=0 // pred_check_branch
    %13 = sbr.rel (0) target = $region9
  $region8: #{tpu_custom_call.1} parent=0 // pred_region
    _
  $region9: #{tpu_custom_call.1} parent=0 // pred_fallthru
    _
  // Predicated region
  $region10: #{tpu_custom_call.1} parent=0 // pred_check
    _
  $region11: #{tpu_custom_call.1} parent=0 // pred_check_branch
    %15 = sbr.rel (0) target = $region13
  $region12: #{tpu_custom_call.1} parent=0 // pred_region
    _
  $region13: #{tpu_custom_call.1} parent=0 // pred_fallthru
    _
  %v16 = vld [vmem:[%s0] sm:$0xf]
  %v17 = vld [vmem:[%s1] sm:$0x1]
  %v19 = vlaneseq
  %v20 = vshrl.u32 %v19, 7
  %v21 = vsub.s32 0, %v20
  %v22 = vrot.slane %v17, %v21
  %v24 = vmul.f32 %v16, %v22
  %vm25 = vcmask 11264
  %v26 = vsel %vm25, %v24, 0.0
  %27 = vadd.xlane.f32.xlu0 %v26
  %v28 = vpop.xlane.xlu0 %27
  %v29 = vld [vmem:[#allocation2] sm:$0x1]
  %v31 = vlaneseq
  %v32 = vshrl.u32 %v31, 7
  %v33 = vsub.s32 0, %v32
  %v34 = vrot.slane %v29, %v33
  %v36 = vadd.f32 %v28, %v34
  %vm37 = vcmask 3072
  %38 = vst.msk [vmem:[%s3] sm:$0xf] %vm37, %v36
  // Predicated region
  $region14: #{tpu_custom_call.1} parent=0 // pred_check
    _
  $region15: #{tpu_custom_call.1} parent=0 // pred_check_branch
    %40 = sbr.rel (0) target = $region17
  $region16: #{tpu_custom_call.1} parent=0 // pred_region
    _
  $region17: #{tpu_custom_call.1} parent=0 // pred_fallthru
    _
  // Predicated region
  $region18: #{tpu_custom_call.1} parent=0 // pred_check
    _
  $region19: #{tpu_custom_call.1} parent=0 // pred_check_branch
    %42 = sbr.rel (0) target = $region21
  $region20: #{tpu_custom_call.1} parent=0 // pred_region
    _
  $region21: #{tpu_custom_call.1} parent=0 // pred_fallthru
    _

</llo_original>
